<compile_context>
chip_gen: v7x
topology: tpu7x:2x2x1
jax: 0.10.0
libtpu: 0.0.40
codegen_flags: <defaults>
</compile_context>

<pallas_src>
import collections
import functools

import numpy as np
import jax
import jax.numpy as jnp
from jax import lax
from jax.experimental import pallas as pl
from jax.experimental.pallas import tpu as pltpu


# ----------------------------------------------------------------------------
# Pallas kernel: per (T-split, M-block, T-tile) contribution to energies and
# descriptor forces, accumulated in the resident output blocks.
# ----------------------------------------------------------------------------
def _gdml_core_kernel(xs_ref, xs_sq_ref, xt_ref, jxa_ref, xt_sq_ref, xt_jxa_ref,
                      fsx_ref, es_ref, *, sig):
    q = float(np.sqrt(5.0) / sig)
    q2 = q * q
    k = pl.program_id(2)                 # T (reduction) axis, innermost

    @pl.when(k == 0)
    def _():                             # output blocks stay resident across k
        fsx_ref[...] = jnp.zeros_like(fsx_ref)
        es_ref[...] = jnp.zeros_like(es_ref)

    xs = xs_ref[...]                     # (m, Dp)  f32, resident over s and k
    xt_b = xt_ref[...]                   # (t, Dp)  bf16 streamed training tile
    jxa_b = jxa_ref[...]                 # (t, Dp)  bf16 streamed tile
    xt = xt_b.astype(jnp.float32)
    xs_b = xs.astype(jnp.bfloat16)

    # ||q xs - q xt||^2 via the Gram identity.  Kept in f32 (cancellation
    # sensitive); xt_sq was precomputed from the same bf16-rounded xt so the
    # identity is self-consistent.  Clamp against f32 cancellation before sqrt.
    gram = lax.dot_general(xs, xt, (((1,), (1,)), ((), ())),
                           preferred_element_type=jnp.float32)        # (m, t)
    d2 = xs_sq_ref[...] + xt_sq_ref[...] - (2.0 * q2) * gram
    x_dists = jnp.sqrt(jnp.maximum(d2, 0.0))                          # (m, t)

    # dot_ = sum_d (q xs - q xt) * Jxa   -- bf16 MXU operands, f32 accumulate.
    dot_ = q * (lax.dot_general(xs_b, jxa_b, (((1,), (1,)), ((), ())),
                                preferred_element_type=jnp.float32)
                - xt_jxa_ref[...])                                    # (m, t)

    # Elementwise chain stays f32 (v5e has no bf16 VPU/EUP).
    exp_xs = (5.0 / (3.0 * sig * sig)) * jnp.exp(-x_dists)            # (m, t)
    exp1 = exp_xs * (1.0 + x_dists)                                   # (m, t)
    w = exp_xs * dot_                                                 # (m, t)

    # F1 = sum_t w_t (q xs - q xt) = q (rowsum(w) * xs - w @ xt)
    # F2 = exp1 @ Jxa
    # Both large matmuls use bf16 operands on the MXU with f32 accumulation.
    f1 = q * (jnp.sum(w, axis=-1, keepdims=True) * xs
              - jnp.dot(w.astype(jnp.bfloat16), xt_b,
                        preferred_element_type=jnp.float32))
    f2 = jnp.dot(exp1.astype(jnp.bfloat16), jxa_b,
                 preferred_element_type=jnp.float32)

    fsx_ref[...] += f1 - f2
    es_ref[...] += jnp.sum(exp1 * dot_, axis=-1, keepdims=True)
    # (scaling by std and the c offset are applied in the wrapper so that the
    #  per-split partial accumulators can simply be summed)


def _round_up(x, m):
    return (x + m - 1) // m * m


def _vmem_budget_bytes():
    """Generation-dependent VMEM cap: ~56 MiB on v7x (64 MiB phys), ~100 MiB on
    v5e/v6e (128 MiB phys).  Falls back to the v7x-safe value if the query fails."""
    cap = 64 * 1024 * 1024
    try:
        cap = int(getattr(pltpu.get_tpu_info(), "vmem_capacity_bytes", cap))
    except Exception:  # pragma: no cover - e.g. interpret mode / old runtime
        pass
    return max(32 * 1024 * 1024, min(100 * 1024 * 1024, cap - 8 * 1024 * 1024))


def _vmem_bytes_estimate(m_tile, t_tile, Dp):
    """Rough double-buffered footprint of the kernel's tiles + intermediates."""
    xs_in = 2 * m_tile * Dp * 4                 # resident f32 descriptor block
    train_in = 2 * 2 * t_tile * Dp * 2          # xt + jxa tiles, bf16, 2-deep
    fsx_out = 2 * m_tile * Dp * 4               # f32 output accumulator block
    inter = 8 * m_tile * t_tile * 4             # (m, t) f32 temporaries
    small = 8 * (m_tile + t_tile) * 4
    return xs_in + train_in + fsx_out + inter + small


# ----------------------------------------------------------------------------
# One-time (model-build) preparation of the static training-set tensors.
# Hoisted out of the per-call path: padding, bf16 cast and row reductions are
# constants of the trained model.
# ----------------------------------------------------------------------------
GDMLModelArrays = collections.namedtuple(
    "GDMLModelArrays", ["xt", "jxa", "xt_sq", "xt_jxa"])


def prepare_gdml_model(xs_train, jx_alphas, *, sig, t_tile=512):
    T, D = xs_train.shape
    q2 = 5.0 / float(sig) ** 2
    Dp = _round_up(D, 128)                      # lane multiple; no extra padding
    t_tile = min(t_tile, _round_up(T, 128))
    Tp = _round_up(T, 2 * t_tile)               # even #T-tiles -> megacore T-split

    # Zero padding is exact: zero Jx_alphas rows / zero descriptor columns
    # contribute exactly 0 to every norm, dot and matmul.
    xt_f = jnp.zeros((Tp, Dp), jnp.float32).at[:T, :D].set(
        xs_train.astype(jnp.float32))
    jxa_f = jnp.zeros((Tp, Dp), jnp.float32).at[:T, :D].set(
        jx_alphas.astype(jnp.float32))
    xt = xt_f.astype(jnp.bfloat16)              # streamed from HBM as bf16
    jxa = jxa_f.astype(jnp.bfloat16)

    # f32 row reductions computed from the bf16-rounded values the kernel
    # actually multiplies -> the Gram identity stays self-consistent.
    xt_r = xt.astype(jnp.float32)
    jxa_r = jxa.astype(jnp.float32)
    xt_sq = q2 * jnp.sum(xt_r * xt_r, axis=-1)[None, :]      # (1, Tp)
    xt_jxa = jnp.sum(xt_r * jxa_r, axis=-1)[None, :]         # (1, Tp)
    return GDMLModelArrays(xt, jxa, xt_sq, xt_jxa), t_tile


# ----------------------------------------------------------------------------
# Hot path: xs (M, D) + prepared model -> Fs_x (M, D), Es (M,)
# ----------------------------------------------------------------------------
def gdml_core(xs, model, *, sig, c, std, t_tile, m_tile=256):
    M, D = xs.shape
    Tp, Dp = model.xt.shape
    q = float(np.sqrt(5.0) / sig)
    q2 = q * q

    # Tile selection against the per-generation VMEM budget.
    m_tile = min(m_tile, _round_up(M, 8))
    budget = _vmem_budget_bytes()
    while (_vmem_bytes_estimate(m_tile, t_tile, Dp) > budget
           and t_tile > 128 and t_tile % 256 == 0):
        t_tile //= 2
    while _vmem_bytes_estimate(m_tile, t_tile, Dp) > budget and m_tile > 8:
        m_tile = max(8, (m_tile // 2) // 8 * 8)
    Mp = _round_up(M, m_tile)
    grid_m = Mp // m_tile
    assert Tp % t_tile == 0
    n_k_total = Tp // t_tile

    # Small-batch megacore split: with a single M block, split the T reduction
    # into two "parallel" halves with separate accumulators (summed below) so a
    # v7x's second TensorCore has work.  No-op cost on single-TC v5e/v6e.
    t_split = 2 if (grid_m < 2 and n_k_total >= 2 and n_k_total % 2 == 0) else 1
    n_k = n_k_total // t_split

    # Per-call preparation: only the test descriptors are padded/reduced here.
    xs_p = jnp.zeros((Mp, Dp), jnp.float32).at[:M, :D].set(
        xs.astype(jnp.float32))
    xs_sq = q2 * jnp.sum(xs_p * xs_p, axis=-1, keepdims=True)     # (Mp, 1) f32

    kern = functools.partial(_gdml_core_kernel, sig=sig)
    fs_raw, es_raw = pl.pallas_call(
        kern,
        out_shape=(jax.ShapeDtypeStruct((t_split * Mp, Dp), jnp.float32),
                   jax.ShapeDtypeStruct((t_split * Mp, 1), jnp.float32)),
        grid_spec=pltpu.PrefetchScalarGridSpec(
            num_scalar_prefetch=0,
            grid=(t_split, grid_m, n_k),
            in_specs=[
                pl.BlockSpec((m_tile, Dp), lambda s, i, k: (i, 0)),   # xs (f32, resident over s,k)
                pl.BlockSpec((m_tile, 1), lambda s, i, k: (i, 0)),    # q^2 ||xs||^2
                pl.BlockSpec((t_tile, Dp),
                             lambda s, i, k: (s * n_k + k, 0)),       # xs_train tile (bf16)
                pl.BlockSpec((t_tile, Dp),
                             lambda s, i, k: (s * n_k + k, 0)),       # Jx_alphas tile (bf16)
                pl.BlockSpec((1, t_tile),
                             lambda s, i, k: (0, s * n_k + k)),       # q^2 ||xt||^2
                pl.BlockSpec((1, t_tile),
                             lambda s, i, k: (0, s * n_k + k)),       # sum_d xt*Jxa
            ],
            out_specs=[
                pl.BlockSpec((m_tile, Dp),
                             lambda s, i, k: (s * grid_m + i, 0)),    # Fs_x accumulator
                pl.BlockSpec((m_tile, 1),
                             lambda s, i, k: (s * grid_m + i, 0)),    # energy accumulator
            ]),
        compiler_params=pltpu.CompilerParams(
            # (T-split, M-block) independent -> shard across TensorCores; T
            # tiles are the serial reduction (innermost).
            dimension_semantics=("parallel", "parallel", "arbitrary"),
            vmem_limit_bytes=budget),
    )(xs_p, xs_sq, model.xt, model.jxa, model.xt_sq, model.xt_jxa)

    fs_x = jnp.sum(fs_raw.reshape(t_split, Mp, Dp), axis=0)[:M, :D] * std
    es = c + jnp.sum(es_raw.reshape(t_split, Mp, 1), axis=0)[:M, 0] * (std / q)
    return fs_x, es


# ----------------------------------------------------------------------------
# Full forward (GDMLTorchPredict._forward): glue + Pallas core.
# ----------------------------------------------------------------------------
def gdml_predict(Rs, model, *, sig, c, std, n_atoms, t_tile, m_tile=256):
    M = Rs.shape[0]
    N = n_atoms
    Rs = Rs.astype(jnp.float32)

    diffs = Rs[:, :, None, :] - Rs[:, None, :, :]          # (M, N, N, 3)
    dists = jnp.sqrt(jnp.sum(diffs * diffs, axis=-1))      # (M, N, N)
    di = np.arange(N)
    dists = dists.at[:, di, di].set(jnp.inf)
    ti, tj = np.tril_indices(N, k=-1)
    xs = 1.0 / dists[:, ti, tj]                            # (M, D)

    fs_x, es = gdml_core(xs, model, sig=sig, c=c, std=std,
                         t_tile=t_tile, m_tile=m_tile)

    # expand_tril + force assembly (index glue, O(M*N^2))
    full = jnp.zeros((M, N, N), fs_x.dtype)
    full = full.at[:, ti, tj].set(fs_x).at[:, tj, ti].set(fs_x)
    Fs = jnp.sum((full / dists ** 3)[..., None] * diffs, axis=1)   # (M, N, 3)
    return es, Fs


# ----------------------------------------------------------------------------
# Pure-JAX transcription of the torch math (reference for validation).
# ----------------------------------------------------------------------------
def reference_forward(Rs, xs_train, jx_alphas, sig, c, std, n_atoms):
    q = np.sqrt(5.0) / sig
    Rs = Rs.astype(jnp.float32)
    diffs = Rs[:, :, None, :] - Rs[:, None, :, :]
    dists = jnp.sqrt(jnp.sum(diffs * diffs, axis=-1))
    di = np.arange(n_atoms)
    dists = dists.at[:, di, di].set(jnp.inf)
    ti, tj = np.tril_indices(n_atoms, k=-1)
    xs = 1.0 / dists[:, ti, tj]
    x_diffs = (q * xs)[:, None, :] - q * xs_train
    x_dists = jnp.sqrt(jnp.sum(x_diffs * x_diffs, axis=-1))
    exp_xs = 5.0 / (3.0 * sig ** 2) * jnp.exp(-x_dists)
    dot_ = jnp.sum(x_diffs * jx_alphas, axis=-1)
    exp1 = exp_xs * (1.0 + x_dists)
    F1 = jnp.sum((exp_xs * dot_)[..., None] * x_diffs, axis=1)
    F2 = exp1 @ jx_alphas
    Fs_x = (F1 - F2) * std
    full = jnp.zeros((Rs.shape[0], n_atoms, n_atoms), Fs_x.dtype)
    full = full.at[:, ti, tj].set(Fs_x).at[:, tj, ti].set(Fs_x)
    Fs = jnp.sum((full / dists ** 3)[..., None] * diffs, axis=1)
    Es = jnp.sum(exp1 * dot_, axis=-1) / q
    Es = c + Es * std
    return Es, Fs


# ----------------------------------------------------------------------------
# Deterministic synthetic "trained model" (mirrors __init__ parameter shapes:
# _xs_train and _Jx_alphas are (n_train * n_perms, desc_siz)).
# ----------------------------------------------------------------------------
def build_synthetic_model(key, n_train, n_perms, n_atoms):
    D = n_atoms * (n_atoms - 1) // 2
    k1, k2 = jax.random.split(key)
    R_train = 2.0 * jax.random.normal(k1, (n_train, n_atoms, 3), jnp.float32)
    d = R_train[:, :, None, :] - R_train[:, None, :, :]
    dd = jnp.sqrt(jnp.sum(d * d, axis=-1))
    ti, tj = np.tril_indices(n_atoms, k=-1)
    xs_base = 1.0 / dd[:, ti, tj]                              # (n_train, D)
    jx_base = 0.05 * jax.random.normal(k2, (n_train, D), jnp.float32)
    perm_desc = np.stack([np.roll(np.arange(D), 7 * p) for p in range(n_perms)])
    xs_train = xs_base[:, perm_desc].reshape(-1, D)            # (T, D)
    jx_alphas = jx_base[:, perm_desc].reshape(-1, D)           # (T, D)
    return jnp.asarray(xs_train), jnp.asarray(jx_alphas)


if __name__ == "__main__":
    key = jax.random.PRNGKey(0)
    k_model, k_rs1, k_rs2 = jax.random.split(key, 3)

    n_atoms, n_train, n_perms = 8, 8, 2        # D = 28, T = 16
    sig, c, std = 10, 12.3, 0.7

    xs_train, jx_alphas = build_synthetic_model(k_model, n_train, n_perms, n_atoms)
    # Static training-set prep (pad + bf16 cast + row reductions): model-build time.
    model, t_tile = prepare_gdml_model(xs_train, jx_alphas, sig=sig)

    def check(Rs, m_tile):
        fwd = jax.jit(functools.partial(gdml_predict, sig=sig, c=c, std=std,
                                        n_atoms=n_atoms, t_tile=t_tile,
                                        m_tile=m_tile))
        Es, Fs = fwd(Rs, model)
        jax.block_until_ready((Es, Fs))
        Es_ref, Fs_ref = reference_forward(Rs, xs_train, jx_alphas,
                                           sig, c, std, n_atoms)
        # Tolerance accounts for the intentional bf16 MXU operands (the torch
        # reference runs in f64; this kernel is f32 with bf16 matmul inputs).
        np.testing.assert_allclose(np.asarray(Es), np.asarray(Es_ref),
                                   rtol=5e-3, atol=5e-4)
        np.testing.assert_allclose(np.asarray(Fs), np.asarray(Fs_ref),
                                   rtol=5e-3, atol=5e-4)

    # Small batch -> single M block -> exercises the 2-way parallel T split.
    check(2.0 * jax.random.normal(k_rs1, (4, n_atoms, 3), jnp.float32), m_tile=256)
    # Larger batch with small m_tile -> multiple M blocks, no T split.
    check(2.0 * jax.random.normal(k_rs2, (40, n_atoms, 3), jnp.float32), m_tile=16)

    print("KERNEL_OK")
</pallas_src>

<mosaic_0001>
module attributes {stable_mosaic.version = 11 : i64} {
  func.func @_gdml_core_kernel(%arg0: i32, %arg1: i32, %arg2: i32, %arg3: memref<8x128xf32, #tpu.memory_space<vmem>>, %arg4: memref<8x1xf32, #tpu.memory_space<vmem>>, %arg5: memref<128x128xbf16, #tpu.memory_space<vmem>>, %arg6: memref<128x128xbf16, #tpu.memory_space<vmem>>, %arg7: memref<1x128xf32, #tpu.memory_space<vmem>>, %arg8: memref<1x128xf32, #tpu.memory_space<vmem>>, %arg9: memref<8x128xf32, #tpu.memory_space<vmem>>, %arg10: memref<8x1xf32, #tpu.memory_space<vmem>>) attributes {dimension_semantics = [#tpu.dimension_semantics<parallel>, #tpu.dimension_semantics<parallel>, #tpu.dimension_semantics<arbitrary>], iteration_bounds = array<i64: 2, 1, 1>, scalar_prefetch = 0 : i64, scratch_operands = 0 : i64, tpu.core_type = #tpu.core_type<tc>, window_params = [{transform_indices = @transform_0, window_bounds = array<i64: 8, 128>}, {transform_indices = @transform_1, window_bounds = array<i64: 8, 1>}, {transform_indices = @transform_2, window_bounds = array<i64: 128, 128>}, {transform_indices = @transform_3, window_bounds = array<i64: 128, 128>}, {transform_indices = @transform_4, window_bounds = array<i64: 1, 128>}, {transform_indices = @transform_5, window_bounds = array<i64: 1, 128>}, {transform_indices = @transform_6, window_bounds = array<i64: 8, 128>}, {transform_indices = @transform_7, window_bounds = array<i64: 8, 1>}]} {
    %c0_i32 = arith.constant 0 : i32
    %0 = arith.cmpi eq, %arg2, %c0_i32 : i32
    %1 = arith.extui %0 : i1 to i32
    %c0_i32_0 = arith.constant 0 : i32
    %2 = arith.cmpi ne, %1, %c0_i32_0 : i32
    scf.if %2 {
      %cst_32 = arith.constant 0.000000e+00 : f32
      %56 = vector.broadcast %cst_32 : f32 to vector<8x128xf32>
      %c0_33 = arith.constant 0 : index
      %c0_34 = arith.constant 0 : index
      %57 = vector.load %arg9[%c0_33, %c0_34] : memref<8x128xf32, #tpu.memory_space<vmem>>, vector<8x128xf32>
      tpu.vector_store %arg9[%c0_33, %c0_34], %56 {strides = array<i32>} : memref<8x128xf32, #tpu.memory_space<vmem>>, vector<8x128xf32>,
      %cst_35 = arith.constant 0.000000e+00 : f32
      %58 = vector.broadcast %cst_35 : f32 to vector<8x1xf32>
      %c0_36 = arith.constant 0 : index
      %c0_37 = arith.constant 0 : index
      %59 = vector.load %arg10[%c0_36, %c0_37] : memref<8x1xf32, #tpu.memory_space<vmem>>, vector<8x1xf32>
      tpu.vector_store %arg10[%c0_36, %c0_37], %58 {strides = array<i32>} : memref<8x1xf32, #tpu.memory_space<vmem>>, vector<8x1xf32>,
    } else {
    }
    %c0 = arith.constant 0 : index
    %c0_1 = arith.constant 0 : index
    %3 = vector.load %arg3[%c0, %c0_1] : memref<8x128xf32, #tpu.memory_space<vmem>>, vector<8x128xf32>
    %c0_2 = arith.constant 0 : index
    %c0_3 = arith.constant 0 : index
    %4 = vector.load %arg5[%c0_2, %c0_3] : memref<128x128xbf16, #tpu.memory_space<vmem>>, vector<128x128xbf16>
    %c0_4 = arith.constant 0 : index
    %c0_5 = arith.constant 0 : index
    %5 = vector.load %arg6[%c0_4, %c0_5] : memref<128x128xbf16, #tpu.memory_space<vmem>>, vector<128x128xbf16>
    %6 = arith.extf %4 : vector<128x128xbf16> to vector<128x128xf32>
    %7 = arith.truncf %3 : vector<8x128xf32> to vector<8x128xbf16>
    %cst = arith.constant dense<0.000000e+00> : vector<8x128xf32>
    %8 = tpu.matmul %3, %6, %cst {dimension_numbers = #tpu.dot_dimension_numbers<[1], [1], [0], [0], [0, 0, 1, 0], [], []>} : vector<8x128xf32>, vector<128x128xf32>, vector<8x128xf32> -> vector<8x128xf32>
    %c0_6 = arith.constant 0 : index
    %c0_7 = arith.constant 0 : index
    %9 = vector.load %arg4[%c0_6, %c0_7] : memref<8x1xf32, #tpu.memory_space<vmem>>, vector<8x1xf32>
    %c0_8 = arith.constant 0 : index
    %c0_9 = arith.constant 0 : index
    %10 = vector.load %arg7[%c0_8, %c0_9] : memref<1x128xf32, #tpu.memory_space<vmem>>, vector<1x128xf32>
    %11 = vector.broadcast %9 : vector<8x1xf32> to vector<8x128xf32>
    %12 = vector.broadcast %10 : vector<1x128xf32> to vector<8x128xf32>
    %13 = arith.addf %11, %12 : vector<8x128xf32>
    %cst_10 = arith.constant 1.000000e-01 : f32
    %14 = vector.broadcast %cst_10 : f32 to vector<8x128xf32>
    %15 = arith.mulf %14, %8 : vector<8x128xf32>
    %16 = arith.subf %13, %15 : vector<8x128xf32>
    %cst_11 = arith.constant 0.000000e+00 : f32
    %17 = vector.broadcast %cst_11 : f32 to vector<8x128xf32>
    %18 = arith.maximumf %16, %17 : vector<8x128xf32>
    %19 = math.sqrt %18 : vector<8x128xf32>
    %cst_12 = arith.constant dense<0.000000e+00> : vector<8x128xf32>
    %20 = tpu.matmul %7, %5, %cst_12 {dimension_numbers = #tpu.dot_dimension_numbers<[1], [1], [0], [0], [0, 0, 1, 0], [], []>} : vector<8x128xbf16>, vector<128x128xbf16>, vector<8x128xf32> -> vector<8x128xf32>
    %c0_13 = arith.constant 0 : index
    %c0_14 = arith.constant 0 : index
    %21 = vector.load %arg8[%c0_13, %c0_14] : memref<1x128xf32, #tpu.memory_space<vmem>>, vector<1x128xf32>
    %22 = vector.broadcast %21 : vector<1x128xf32> to vector<8x128xf32>
    %23 = arith.subf %20, %22 : vector<8x128xf32>
    %cst_15 = arith.constant 0.223606795 : f32
    %24 = vector.broadcast %cst_15 : f32 to vector<8x128xf32>
    %25 = arith.mulf %24, %23 : vector<8x128xf32>
    %cst_16 = arith.constant 0.000000e+00 : f32
    %26 = vector.broadcast %cst_16 : f32 to vector<8x128xf32>
    %27 = arith.subf %26, %19 : vector<8x128xf32>
    %28 = math.exp %27 : vector<8x128xf32>
    %cst_17 = arith.constant 0.0166666675 : f32
    %29 = vector.broadcast %cst_17 : f32 to vector<8x128xf32>
    %30 = arith.mulf %29, %28 : vector<8x128xf32>
    %cst_18 = arith.constant 1.000000e+00 : f32
    %31 = vector.broadcast %cst_18 : f32 to vector<8x128xf32>
    %32 = arith.addf %31, %19 : vector<8x128xf32>
    %33 = arith.mulf %30, %32 : vector<8x128xf32>
    %34 = arith.mulf %30, %25 : vector<8x128xf32>
    %cst_19 = arith.constant dense<0.000000e+00> : vector<8xf32>
    %35 = vector.multi_reduction <add>, %34, %cst_19 [1] : vector<8x128xf32> to vector<8xf32>
    %36 = vector.shape_cast %35 : vector<8xf32> to vector<8x1xf32>
    %37 = vector.broadcast %36 : vector<8x1xf32> to vector<8x128xf32>
    %38 = arith.mulf %37, %3 : vector<8x128xf32>
    %39 = arith.truncf %34 : vector<8x128xf32> to vector<8x128xbf16>
    %cst_20 = arith.constant dense<0.000000e+00> : vector<8x128xf32>
    %40 = tpu.matmul %39, %4, %cst_20 {dimension_numbers = #tpu.dot_dimension_numbers<[1], [0], [0], [1], [0, 0, 1, 1], [], []>} : vector<8x128xbf16>, vector<128x128xbf16>, vector<8x128xf32> -> vector<8x128xf32>
    %41 = arith.subf %38, %40 : vector<8x128xf32>
    %cst_21 = arith.constant 0.223606795 : f32
    %42 = vector.broadcast %cst_21 : f32 to vector<8x128xf32>
    %43 = arith.mulf %42, %41 : vector<8x128xf32>
    %44 = arith.truncf %33 : vector<8x128xf32> to vector<8x128xbf16>
    %cst_22 = arith.constant dense<0.000000e+00> : vector<8x128xf32>
    %45 = tpu.matmul %44, %5, %cst_22 {dimension_numbers = #tpu.dot_dimension_numbers<[1], [0], [0], [1], [0, 0, 1, 1], [], []>} : vector<8x128xbf16>, vector<128x128xbf16>, vector<8x128xf32> -> vector<8x128xf32>
    %c0_23 = arith.constant 0 : index
    %c0_24 = arith.constant 0 : index
    %46 = vector.load %arg9[%c0_23, %c0_24] : memref<8x128xf32, #tpu.memory_space<vmem>>, vector<8x128xf32>
    %47 = arith.subf %43, %45 : vector<8x128xf32>
    %48 = arith.addf %46, %47 : vector<8x128xf32>
    %c0_25 = arith.constant 0 : index
    %c0_26 = arith.constant 0 : index
    %49 = vector.load %arg9[%c0_25, %c0_26] : memref<8x128xf32, #tpu.memory_space<vmem>>, vector<8x128xf32>
    tpu.vector_store %arg9[%c0_25, %c0_26], %48 {strides = array<i32>} : memref<8x128xf32, #tpu.memory_space<vmem>>, vector<8x128xf32>,
    %c0_27 = arith.constant 0 : index
    %c0_28 = arith.constant 0 : index
    %50 = vector.load %arg10[%c0_27, %c0_28] : memref<8x1xf32, #tpu.memory_space<vmem>>, vector<8x1xf32>
    %51 = arith.mulf %33, %25 : vector<8x128xf32>
    %cst_29 = arith.constant dense<0.000000e+00> : vector<8xf32>
    %52 = vector.multi_reduction <add>, %51, %cst_29 [1] : vector<8x128xf32> to vector<8xf32>
    %53 = vector.shape_cast %52 : vector<8xf32> to vector<8x1xf32>
    %54 = arith.addf %50, %53 : vector<8x1xf32>
    %c0_30 = arith.constant 0 : index
    %c0_31 = arith.constant 0 : index
    %55 = vector.load %arg10[%c0_30, %c0_31] : memref<8x1xf32, #tpu.memory_space<vmem>>, vector<8x1xf32>
    tpu.vector_store %arg10[%c0_30, %c0_31], %54 {strides = array<i32>} : memref<8x1xf32, #tpu.memory_space<vmem>>, vector<8x1xf32>,
    return
  }
  func.func @transform_0(%arg0: i32, %arg1: i32, %arg2: i32) -> (i32, i32) {
    %c0_i32 = arith.constant 0 : i32
    %c0_i32_0 = arith.constant 0 : i32
    return %arg1, %c0_i32 : i32, i32
  }
  func.func @transform_1(%arg0: i32, %arg1: i32, %arg2: i32) -> (i32, i32) {
    %c0_i32 = arith.constant 0 : i32
    %c0_i32_0 = arith.constant 0 : i32
    return %arg1, %c0_i32 : i32, i32
  }
  func.func @transform_2(%arg0: i32, %arg1: i32, %arg2: i32) -> (i32, i32) {
    %c1_i32 = arith.constant 1 : i32
    %0 = arith.muli %arg0, %c1_i32 : i32
    %1 = arith.addi %0, %arg2 : i32
    %c0_i32 = arith.constant 0 : i32
    %c0_i32_0 = arith.constant 0 : i32
    return %1, %c0_i32 : i32, i32
  }
  func.func @transform_3(%arg0: i32, %arg1: i32, %arg2: i32) -> (i32, i32) {
    %c1_i32 = arith.constant 1 : i32
    %0 = arith.muli %arg0, %c1_i32 : i32
    %1 = arith.addi %0, %arg2 : i32
    %c0_i32 = arith.constant 0 : i32
    %c0_i32_0 = arith.constant 0 : i32
    return %1, %c0_i32 : i32, i32
  }
  func.func @transform_4(%arg0: i32, %arg1: i32, %arg2: i32) -> (i32, i32) {
    %c1_i32 = arith.constant 1 : i32
    %0 = arith.muli %arg0, %c1_i32 : i32
    %1 = arith.addi %0, %arg2 : i32
    %c0_i32 = arith.constant 0 : i32
    %c0_i32_0 = arith.constant 0 : i32
    return %c0_i32, %1 : i32, i32
  }
  func.func @transform_5(%arg0: i32, %arg1: i32, %arg2: i32) -> (i32, i32) {
    %c1_i32 = arith.constant 1 : i32
    %0 = arith.muli %arg0, %c1_i32 : i32
    %1 = arith.addi %0, %arg2 : i32
    %c0_i32 = arith.constant 0 : i32
    %c0_i32_0 = arith.constant 0 : i32
    return %c0_i32, %1 : i32, i32
  }
  func.func @transform_6(%arg0: i32, %arg1: i32, %arg2: i32) -> (i32, i32) {
    %c1_i32 = arith.constant 1 : i32
    %0 = arith.muli %arg0, %c1_i32 : i32
    %1 = arith.addi %0, %arg1 : i32
    %c0_i32 = arith.constant 0 : i32
    %c0_i32_0 = arith.constant 0 : i32
    return %1, %c0_i32 : i32, i32
  }
  func.func @transform_7(%arg0: i32, %arg1: i32, %arg2: i32) -> (i32, i32) {
    %c1_i32 = arith.constant 1 : i32
    %0 = arith.muli %arg0, %c1_i32 : i32
    %1 = arith.addi %0, %arg1 : i32
    %c0_i32 = arith.constant 0 : i32
    %c0_i32_0 = arith.constant 0 : i32
    return %1, %c0_i32 : i32, i32
  }
}

</mosaic_0001>

<llo_original>
// kernel: gdml_predict.1
$region0: #{gdml_predict.1}
  #allocation0 [shape = 'u32[]', space=smem, size = 0x4, offset = 0x4, fixed_abs, tag = 'smem constant byte address 0x4 - core index']
  #allocation1 [shape = 'u32[144,128]{1,0:T(1,128)}', space=vmem, size = 0x12000, scoped, tag = 'internal scratch']
  %s0 = inlined_call_operand.vmem [shape: f32[8,128], index: 0, kind: input, shape index: {}]
  %s1 = inlined_call_operand.vmem [shape: f32[8,1], index: 1, kind: input, shape index: {}]
  %s2 = inlined_call_operand.vmem [shape: bf16[256,128], index: 2, kind: input, shape index: {}]
  %s3 = inlined_call_operand.vmem [shape: bf16[256,128], index: 3, kind: input, shape index: {}]
  %s4 = inlined_call_operand.vmem [shape: f32[1,256], index: 4, kind: input, shape index: {}]
  %s5 = inlined_call_operand.vmem [shape: f32[1,256], index: 5, kind: input, shape index: {}]
  %s6 = inlined_call_operand.vmem [shape: f32[16,128], index: 6, kind: output, shape index: {0}]
  %s7 = inlined_call_operand.vmem [shape: f32[16,1], index: 7, kind: output, shape index: {1}]
  %8 = xla_tuple %s6, %s7
  %s9 = sld [smem:[#allocation0]]
  $region69: #{gdml_predict.1} parent=0
    _
  %s11 = ssub.s32 1, %s9
  %s12 = scalar_select 0, %s11, %s9
  loop: start=0, step=1, limit=4
  $region2: #{gdml_predict.1} parent=0 // loop_pre_header
    _
  $region3: #{gdml_predict.1} parent=0 // loop_header
    %s14 = sphi 0, %s18
    %p15 = scmp.ge.s32.totalorder %s14, 4
    %s21 = sphi 0, %s40
    %s22 = sphi 0, %s36
    %s23 = sphi 0, %s32
    %s24 = sphi 0, %s21
    %s25 = sphi 0, %s22
    %s26 = sphi 0, %s23
    %s27 = sphi 0, %s24
    %s28 = sphi 0, %s25
    %s29 = sphi 0, %s26
    %s43 = sphi 0, %s45
    %s46 = sphi 0, %s43
    %s47 = sphi 0, %s46
    %s63 = sphi 0, %s47
    %s69 = sphi 0, %s71
    %s72 = sphi 0, %s69
    %s73 = sphi 0, %s72
    %s89 = sphi 0, %s73
    %s97 = sphi 0, %s99
    %s100 = sphi 0, %s97
    %s101 = sphi 0, %s100
    %s117 = sphi 0, %s101
    %s125 = sphi 0, %s127
    %s128 = sphi 0, %s125
    %s129 = sphi 0, %s128
    %s145 = sphi 0, %s129
    %s153 = sphi 0, %s155
    %s156 = sphi 0, %s153
    %s157 = sphi 0, %s156
    %s173 = sphi 0, %s157
    %s181 = sphi 0, %s183
    %s184 = sphi 0, %s181
    %s185 = sphi 0, %s184
    %s201 = sphi 0, %s185
    %s209 = sphi 0, %s211
    %s212 = sphi 0, %s209
    %s213 = sphi 0, %s212
    %s229 = sphi 0, %s213
    %s237 = sphi 0, %s239
    %s240 = sphi 0, %s237
    %s241 = sphi 0, %s240
    %s257 = sphi 0, %s241
  $region4: #{gdml_predict.1} parent=0 // loop_header_branch
    %17 = sbr.rel (%p15) target = $region8
  $region5: #{gdml_predict.1} parent=0 // loop_body
    %s19 = ssub.s32 %s14, 1
    %s20 = ssub.s32 %s14, 2
    %s30 = sadd.s32 1, %s23
    %p31 = scmp.ge.s32.totalorder %s30, 1
    %s32 = scalar_select %p31, 0, %s30
    %s33 = sadd.s32 1, %s22
    %s34 = scalar_select %p31, %s33, %s22
    %p35 = scmp.ge.s32.totalorder %s34, 1
    %s36 = scalar_select %p35, 0, %s34
    %s37 = sadd.s32 1, %s21
    %s38 = scalar_select %p35, %s37, %s21
    %p39 = scmp.ge.s32.totalorder %s38, 2
    %s40 = scalar_select %p39, 0, %s38
    %s41 = ssub.s32 %s22, %s36
    %p42 = scmp.eq.s32.totalorder %s41, 0
    %s44 = sadd.s32 %s43, 1
    %s45 = scalar_select %p42, %s43, %s44
    %p48 = pneg %p42
    %p49 = scmp.eq.s32.totalorder %s14, 1
    %p50 = por %p48, %p49
    %p51 = scmp.ne.s32.totalorder %s43, %s46
    %p52 = scmp.eq.s32.totalorder %s14, 0
    %p53 = por %p51, %p52
    %p54 = scmp.ne.s32.totalorder %s43, %s46
    %p55 = scmp.eq.s32.totalorder %s19, 1
    %p56 = por %p54, %p55
    %p57 = scmp.ne.s32.totalorder %s46, %s47
    %p58 = scmp.eq.s32.totalorder %s19, 0
    %p59 = por %p57, %p58
    %p60 = scmp.ne.s32.totalorder %s46, %s47
    %p61 = scmp.eq.s32.totalorder %s20, 1
    %p62 = por %p60, %p61
    %p64 = scmp.ne.s32.totalorder %s47, %s63
    %p65 = scmp.eq.s32.totalorder %s20, 0
    %p66 = por %p64, %p65
    %s67 = ssub.s32 %s22, %s36
    %p68 = scmp.eq.s32.totalorder %s67, 0
    %s70 = sadd.s32 %s69, 1
    %s71 = scalar_select %p68, %s69, %s70
    %p74 = pneg %p68
    %p75 = scmp.eq.s32.totalorder %s14, 1
    %p76 = por %p74, %p75
    %p77 = scmp.ne.s32.totalorder %s69, %s72
    %p78 = scmp.eq.s32.totalorder %s14, 0
    %p79 = por %p77, %p78
    %p80 = scmp.ne.s32.totalorder %s69, %s72
    %p81 = scmp.eq.s32.totalorder %s19, 1
    %p82 = por %p80, %p81
    %p83 = scmp.ne.s32.totalorder %s72, %s73
    %p84 = scmp.eq.s32.totalorder %s19, 0
    %p85 = por %p83, %p84
    %p86 = scmp.ne.s32.totalorder %s72, %s73
    %p87 = scmp.eq.s32.totalorder %s20, 1
    %p88 = por %p86, %p87
    %p90 = scmp.ne.s32.totalorder %s73, %s89
    %p91 = scmp.eq.s32.totalorder %s20, 0
    %p92 = por %p90, %p91
    %s93 = sadd.s32 %s21, %s23
    %s94 = sadd.s32 %s40, %s32
    %s95 = ssub.s32 %s93, %s94
    %p96 = scmp.eq.s32.totalorder %s95, 0
    %s98 = sadd.s32 %s97, 1
    %s99 = scalar_select %p96, %s97, %s98
    %p102 = pneg %p96
    %p103 = scmp.eq.s32.totalorder %s14, 1
    %p104 = por %p102, %p103
    %p105 = scmp.ne.s32.totalorder %s97, %s100
    %p106 = scmp.eq.s32.totalorder %s14, 0
    %p107 = por %p105, %p106
    %p108 = scmp.ne.s32.totalorder %s97, %s100
    %p109 = scmp.eq.s32.totalorder %s19, 1
    %p110 = por %p108, %p109
    %p111 = scmp.ne.s32.totalorder %s100, %s101
    %p112 = scmp.eq.s32.totalorder %s19, 0
    %p113 = por %p111, %p112
    %p114 = scmp.ne.s32.totalorder %s100, %s101
    %p115 = scmp.eq.s32.totalorder %s20, 1
    %p116 = por %p114, %p115
    %p118 = scmp.ne.s32.totalorder %s101, %s117
    %p119 = scmp.eq.s32.totalorder %s20, 0
    %p120 = por %p118, %p119
    %s121 = sadd.s32 %s21, %s23
    %s122 = sadd.s32 %s40, %s32
    %s123 = ssub.s32 %s121, %s122
    %p124 = scmp.eq.s32.totalorder %s123, 0
    %s126 = sadd.s32 %s125, 1
    %s127 = scalar_select %p124, %s125, %s126
    %p130 = pneg %p124
    %p131 = scmp.eq.s32.totalorder %s14, 1
    %p132 = por %p130, %p131
    %p133 = scmp.ne.s32.totalorder %s125, %s128
    %p134 = scmp.eq.s32.totalorder %s14, 0
    %p135 = por %p133, %p134
    %p136 = scmp.ne.s32.totalorder %s125, %s128
    %p137 = scmp.eq.s32.totalorder %s19, 1
    %p138 = por %p136, %p137
    %p139 = scmp.ne.s32.totalorder %s128, %s129
    %p140 = scmp.eq.s32.totalorder %s19, 0
    %p141 = por %p139, %p140
    %p142 = scmp.ne.s32.totalorder %s128, %s129
    %p143 = scmp.eq.s32.totalorder %s20, 1
    %p144 = por %p142, %p143
    %p146 = scmp.ne.s32.totalorder %s129, %s145
    %p147 = scmp.eq.s32.totalorder %s20, 0
    %p148 = por %p146, %p147
    %s149 = sadd.s32 %s21, %s23
    %s150 = sadd.s32 %s40, %s32
    %s151 = ssub.s32 %s149, %s150
    %p152 = scmp.eq.s32.totalorder %s151, 0
    %s154 = sadd.s32 %s153, 1
    %s155 = scalar_select %p152, %s153, %s154
    %p158 = pneg %p152
    %p159 = scmp.eq.s32.totalorder %s14, 1
    %p160 = por %p158, %p159
    %p161 = scmp.ne.s32.totalorder %s153, %s156
    %p162 = scmp.eq.s32.totalorder %s14, 0
    %p163 = por %p161, %p162
    %p164 = scmp.ne.s32.totalorder %s153, %s156
    %p165 = scmp.eq.s32.totalorder %s19, 1
    %p166 = por %p164, %p165
    %p167 = scmp.ne.s32.totalorder %s156, %s157
    %p168 = scmp.eq.s32.totalorder %s19, 0
    %p169 = por %p167, %p168
    %p170 = scmp.ne.s32.totalorder %s156, %s157
    %p171 = scmp.eq.s32.totalorder %s20, 1
    %p172 = por %p170, %p171
    %p174 = scmp.ne.s32.totalorder %s157, %s173
    %p175 = scmp.eq.s32.totalorder %s20, 0
    %p176 = por %p174, %p175
    %s177 = sadd.s32 %s21, %s23
    %s178 = sadd.s32 %s40, %s32
    %s179 = ssub.s32 %s177, %s178
    %p180 = scmp.eq.s32.totalorder %s179, 0
    %s182 = sadd.s32 %s181, 1
    %s183 = scalar_select %p180, %s181, %s182
    %p186 = pneg %p180
    %p187 = scmp.eq.s32.totalorder %s14, 1
    %p188 = por %p186, %p187
    %p189 = scmp.ne.s32.totalorder %s181, %s184
    %p190 = scmp.eq.s32.totalorder %s14, 0
    %p191 = por %p189, %p190
    %p192 = scmp.ne.s32.totalorder %s181, %s184
    %p193 = scmp.eq.s32.totalorder %s19, 1
    %p194 = por %p192, %p193
    %p195 = scmp.ne.s32.totalorder %s184, %s185
    %p196 = scmp.eq.s32.totalorder %s19, 0
    %p197 = por %p195, %p196
    %p198 = scmp.ne.s32.totalorder %s184, %s185
    %p199 = scmp.eq.s32.totalorder %s20, 1
    %p200 = por %p198, %p199
    %p202 = scmp.ne.s32.totalorder %s185, %s201
    %p203 = scmp.eq.s32.totalorder %s20, 0
    %p204 = por %p202, %p203
    %s205 = sadd.s32 %s21, %s22
    %s206 = sadd.s32 %s40, %s36
    %s207 = ssub.s32 %s205, %s206
    %p208 = scmp.eq.s32.totalorder %s207, 0
    %s210 = sadd.s32 %s209, 1
    %s211 = scalar_select %p208, %s209, %s210
    %p214 = pneg %p208
    %p215 = scmp.eq.s32.totalorder %s14, 1
    %p216 = por %p214, %p215
    %p217 = scmp.ne.s32.totalorder %s209, %s212
    %p218 = scmp.eq.s32.totalorder %s14, 0
    %p219 = por %p217, %p218
    %p220 = scmp.ne.s32.totalorder %s209, %s212
    %p221 = scmp.eq.s32.totalorder %s19, 1
    %p222 = por %p220, %p221
    %p223 = scmp.ne.s32.totalorder %s212, %s213
    %p224 = scmp.eq.s32.totalorder %s19, 0
    %p225 = por %p223, %p224
    %p226 = scmp.ne.s32.totalorder %s212, %s213
    %p227 = scmp.eq.s32.totalorder %s20, 1
    %p228 = por %p226, %p227
    %p230 = scmp.ne.s32.totalorder %s213, %s229
    %p231 = scmp.eq.s32.totalorder %s20, 0
    %p232 = por %p230, %p231
    %s233 = sadd.s32 %s21, %s22
    %s234 = sadd.s32 %s40, %s36
    %s235 = ssub.s32 %s233, %s234
    %p236 = scmp.eq.s32.totalorder %s235, 0
    %s238 = sadd.s32 %s237, 1
    %s239 = scalar_select %p236, %s237, %s238
    %p242 = pneg %p236
    %p243 = scmp.eq.s32.totalorder %s14, 1
    %p244 = por %p242, %p243
    %p245 = scmp.ne.s32.totalorder %s237, %s240
    %p246 = scmp.eq.s32.totalorder %s14, 0
    %p247 = por %p245, %p246
    %p248 = scmp.ne.s32.totalorder %s237, %s240
    %p249 = scmp.eq.s32.totalorder %s19, 1
    %p250 = por %p248, %p249
    %p251 = scmp.ne.s32.totalorder %s240, %s241
    %p252 = scmp.eq.s32.totalorder %s19, 0
    %p253 = por %p251, %p252
    %p254 = scmp.ne.s32.totalorder %s240, %s241
    %p255 = scmp.eq.s32.totalorder %s20, 1
    %p256 = por %p254, %p255
    %p258 = scmp.ne.s32.totalorder %s241, %s257
    %p259 = scmp.eq.s32.totalorder %s20, 0
    %p260 = por %p258, %p259
    %p261 = scmp.le.s32.totalorder 1, %s14
    %p262 = scmp.lt.s32.totalorder %s14, 3
    %p263 = pnand %p261, %p262
    %p264 = pneg %p263
    // Predicated region
    $region9: #{gdml_predict.1} parent=5 // pred_check
      _
    $region10: #{gdml_predict.1} parent=5 // pred_check_branch
      %266 = sbr.rel (%p263) target = $region12
    $region11: #{gdml_predict.1} parent=5 // pred_region
      %s267 = ssub.s32 %s14, 1
      // Predicated region
      $region13: #{gdml_predict.1} parent=11 // pred_check
        %p268 = pneg %p59
      $region14: #{gdml_predict.1} parent=11 // pred_check_branch
        %270 = sbr.rel (%p268) target = $region16
      $region15: #{gdml_predict.1} parent=11 // pred_region
        %p271 = scmp.lt.s32.totalorder %s25, 0
        %s272 = scalar_select %p271, %s25, 0
        %s273 = smul.addr %s272, 8
        %s274 = scalar_lea.vmem %s0, %s273
      $region16: #{gdml_predict.1} parent=11 // pred_fallthru
        _
      // Predicated region
      $region17: #{gdml_predict.1} parent=11 // pred_check
        %p275 = pneg %p85
      $region18: #{gdml_predict.1} parent=11 // pred_check_branch
        %277 = sbr.rel (%p275) target = $region20
      $region19: #{gdml_predict.1} parent=11 // pred_region
        %p278 = scmp.lt.s32.totalorder %s25, 0
        %s279 = scalar_select %p278, %s25, 0
        %s280 = smul.addr %s279, 8
        %s281 = scalar_lea.vmem %s1, %s280
      $region20: #{gdml_predict.1} parent=11 // pred_fallthru
        _
    $region12: #{gdml_predict.1} parent=5 // pred_fallthru
      _
    %p282 = scmp.lt.s32.totalorder %s14, 2
    // Predicated region
    $region21: #{gdml_predict.1} parent=5 // pred_check
      %p283 = pneg %p282
    $region22: #{gdml_predict.1} parent=5 // pred_check_branch
      %285 = sbr.rel (%p283) target = $region24
    $region23: #{gdml_predict.1} parent=5 // pred_region
      // Predicated region
      $region25: #{gdml_predict.1} parent=23 // pred_check
        %p286 = pneg %p107
      $region26: #{gdml_predict.1} parent=23 // pred_check_branch
        %288 = sbr.rel (%p286) target = $region28
      $region27: #{gdml_predict.1} parent=23 // pred_region
        %s289 = sadd.s32 %s21, %s23
        %s290 = smul.u32 16, %s289
        %p291 = scmp.lt.s32.totalorder %s290, 31
        %s292 = scalar_select %p291, %s290, 31
        %s293 = smul.addr %s292, 4
        %s294 = scalar_lea.vmem %s2, %s293
        %s295 = sadd.s32 %s21, %s23
        %s296 = smul.u32 16, %s295
      $region28: #{gdml_predict.1} parent=23 // pred_fallthru
        _
      // Predicated region
      $region29: #{gdml_predict.1} parent=23 // pred_check
        %p297 = pneg %p135
      $region30: #{gdml_predict.1} parent=23 // pred_check_branch
        %299 = sbr.rel (%p297) target = $region32
      $region31: #{gdml_predict.1} parent=23 // pred_region
        %s300 = sadd.s32 %s21, %s23
        %s301 = smul.u32 16, %s300
        %p302 = scmp.lt.s32.totalorder %s301, 31
        %s303 = scalar_select %p302, %s301, 31
        %s304 = smul.addr %s303, 4
        %s305 = scalar_lea.vmem %s3, %s304
        %s306 = sadd.s32 %s21, %s23
        %s307 = smul.u32 16, %s306
      $region32: #{gdml_predict.1} parent=23 // pred_fallthru
        _
      // Predicated region
      $region33: #{gdml_predict.1} parent=23 // pred_check
        %p308 = pneg %p163
      $region34: #{gdml_predict.1} parent=23 // pred_check_branch
        %310 = sbr.rel (%p308) target = $region36
      $region35: #{gdml_predict.1} parent=23 // pred_region
        %s311 = sadd.s32 %s21, %s23
        %p312 = scmp.lt.s32.totalorder %s311, 1
        %s313 = scalar_select %p312, %s311, 1
        %s314 = scalar_lea.vmem %s4, %s313
        %s315 = sadd.s32 %s21, %s23
      $region36: #{gdml_predict.1} parent=23 // pred_fallthru
        _
      // Predicated region
      $region37: #{gdml_predict.1} parent=23 // pred_check
        %p316 = pneg %p191
      $region38: #{gdml_predict.1} parent=23 // pred_check_branch
        %318 = sbr.rel (%p316) target = $region40
      $region39: #{gdml_predict.1} parent=23 // pred_region
        %s319 = sadd.s32 %s21, %s23
        %p320 = scmp.lt.s32.totalorder %s319, 1
        %s321 = scalar_select %p320, %s319, 1
        %s322 = scalar_lea.vmem %s5, %s321
        %s323 = sadd.s32 %s21, %s23
      $region40: #{gdml_predict.1} parent=23 // pred_fallthru
        _
    $region24: #{gdml_predict.1} parent=5 // pred_fallthru
      _
    %p324 = scmp.le.s32.totalorder 1, %s14
    %p325 = scmp.lt.s32.totalorder %s14, 3
    %p326 = pnand %p324, %p325
    %p327 = pneg %p326
    // Predicated region
    $region41: #{gdml_predict.1} parent=5 // pred_check
      _
    $region42: #{gdml_predict.1} parent=5 // pred_check_branch
      %329 = sbr.rel (%p326) target = $region44
    $region43: #{gdml_predict.1} parent=5 // pred_region
      %s330 = ssub.s32 %s14, 1
      %p331 = scmp.lt.s32.totalorder %s25, 0
      %s332 = scalar_select %p331, %s25, 0
      %s333 = smul.addr %s332, 8
      %s334 = scalar_lea.vmem %s0, %s333
      %p335 = pneg %p59
      %p336 = pneg %p56
      %p337 = scmp.lt.s32.totalorder %s25, 0
      %s338 = scalar_select %p337, %s25, 0
      %s339 = smul.addr %s338, 8
      %s340 = scalar_lea.vmem %s1, %s339
      %p341 = pneg %p85
      %p342 = pneg %p82
      %s343 = sadd.s32 %s24, %s26
      %s344 = smul.u32 16, %s343
      %p345 = scmp.lt.s32.totalorder %s344, 31
      %s346 = scalar_select %p345, %s344, 31
      %s347 = smul.addr %s346, 4
      %s348 = scalar_lea.vmem %s2, %s347
      %p349 = pneg %p113
      %p350 = pneg %p110
      %s351 = sadd.s32 %s24, %s26
      %s352 = smul.u32 16, %s351
      %p353 = scmp.lt.s32.totalorder %s352, 31
      %s354 = scalar_select %p353, %s352, 31
      %s355 = smul.addr %s354, 4
      %s356 = scalar_lea.vmem %s3, %s355
      %p357 = pneg %p141
      %p358 = pneg %p138
      %s359 = sadd.s32 %s24, %s26
      %p360 = scmp.lt.s32.totalorder %s359, 1
      %s361 = scalar_select %p360, %s359, 1
      %s362 = scalar_lea.vmem %s4, %s361
      %p363 = pneg %p169
      %p364 = pneg %p166
      %s365 = sadd.s32 %s24, %s26
      %p366 = scmp.lt.s32.totalorder %s365, 1
      %s367 = scalar_select %p366, %s365, 1
      %s368 = scalar_lea.vmem %s5, %s367
      %p369 = pneg %p197
      %p370 = pneg %p194
      %p371 = pneg %p225
      %p372 = pneg %p222
      %s373 = sadd.s32 %s24, %s25
      %p374 = scmp.lt.s32.totalorder %s373, 1
      %s375 = scalar_select %p374, %s373, 1
      %s376 = smul.addr %s375, 8
      %s377 = scalar_lea.vmem %s6, %s376
      %p378 = pneg %p253
      %p379 = pneg %p250
      %s380 = sadd.s32 %s24, %s25
      %p381 = scmp.lt.s32.totalorder %s380, 1
      %s382 = scalar_select %p381, %s380, 1
      %s383 = smul.addr %s382, 8
      %s384 = scalar_lea.vmem %s7, %s383
      %p385 = scmp.lt.s32.totalorder %s25, 0
      %s386 = scalar_select %p385, %s25, 0
      %s387 = smul.addr %s386, 8
      %s388 = scalar_lea.vmem %s0, %s387
      %p389 = scmp.lt.s32.totalorder %s25, 0
      %s390 = scalar_select %p389, %s25, 0
      %s391 = smul.addr %s390, 8
      %s392 = scalar_lea.vmem %s1, %s391
      %s393 = sadd.s32 %s24, %s26
      %s394 = smul.u32 16, %s393
      %p395 = scmp.lt.s32.totalorder %s394, 31
      %s396 = scalar_select %p395, %s394, 31
      %s397 = smul.addr %s396, 4
      %s398 = scalar_lea.vmem %s2, %s397
      %s399 = sadd.s32 %s24, %s26
      %s400 = smul.u32 16, %s399
      %s401 = sadd.s32 %s24, %s26
      %s402 = smul.u32 16, %s401
      %p403 = scmp.lt.s32.totalorder %s402, 31
      %s404 = scalar_select %p403, %s402, 31
      %s405 = smul.addr %s404, 4
      %s406 = scalar_lea.vmem %s3, %s405
      %s407 = sadd.s32 %s24, %s26
      %s408 = smul.u32 16, %s407
      %s409 = sadd.s32 %s24, %s26
      %p410 = scmp.lt.s32.totalorder %s409, 1
      %s411 = scalar_select %p410, %s409, 1
      %s412 = scalar_lea.vmem %s4, %s411
      %s413 = sadd.s32 %s24, %s26
      %s414 = sadd.s32 %s24, %s26
      %p415 = scmp.lt.s32.totalorder %s414, 1
      %s416 = scalar_select %p415, %s414, 1
      %s417 = scalar_lea.vmem %s5, %s416
      %s418 = sadd.s32 %s24, %s26
      %s419 = sadd.s32 %s24, %s25
      %p420 = scmp.lt.s32.totalorder %s419, 1
      %s421 = scalar_select %p420, %s419, 1
      %s422 = smul.addr %s421, 8
      %s423 = scalar_lea.vmem %s6, %s422
      %s424 = sadd.s32 %s24, %s25
      %s425 = sadd.s32 %s24, %s25
      %p426 = scmp.lt.s32.totalorder %s425, 1
      %s427 = scalar_select %p426, %s425, 1
      %s428 = smul.addr %s427, 8
      %s429 = scalar_lea.vmem %s7, %s428
      %s430 = sadd.s32 %s24, %s25
      %p432 = scmp.eq.s32.totalorder %s26, 0
      // Predicated region
      $region45: #{gdml_predict.1} parent=43 // pred_check
        %p433 = pneg %p432
      $region46: #{gdml_predict.1} parent=43 // pred_check_branch
        %435 = sbr.rel (%p433) target = $region48
      $region47: #{gdml_predict.1} parent=43 // pred_region
        %436 = vst [vmem:[%s423] sm:$0xff] 0.0
        %vm437 = vcmask 7168
        %438 = vst.msk [vmem:[%s429] sm:$0xff] %vm437, 0.0
      $region48: #{gdml_predict.1} parent=43 // pred_fallthru
        _
      %v439 = vld [vmem:[%s388] sm:$0xff]
      %v440 = vld [vmem:[%s398] sm:$0xf]
      %v441 = vld [vmem:[%s398 + $0x4] sm:$0xf]
      %v442 = vld [vmem:[%s398 + $0x8] sm:$0xf]
      %v443 = vld [vmem:[%s398 + $0xc] sm:$0xf]
      %v444 = vld [vmem:[%s398 + $0x10] sm:$0xf]
      %v445 = vld [vmem:[%s398 + $0x14] sm:$0xf]
      %v446 = vld [vmem:[%s398 + $0x18] sm:$0xf]
      %v447 = vld [vmem:[%s398 + $0x1c] sm:$0xf]
      %v448 = vld [vmem:[%s398 + $0x20] sm:$0xf]
      %v449 = vld [vmem:[%s398 + $0x24] sm:$0xf]
      %v450 = vld [vmem:[%s398 + $0x28] sm:$0xf]
      %v451 = vld [vmem:[%s398 + $0x2c] sm:$0xf]
      %v452 = vld [vmem:[%s398 + $0x30] sm:$0xf]
      %v453 = vld [vmem:[%s398 + $0x34] sm:$0xf]
      %v454 = vld [vmem:[%s398 + $0x38] sm:$0xf]
      %v455 = vld [vmem:[%s398 + $0x3c] sm:$0xf]
      %v456 = vld [vmem:[%s406] sm:$0xf]
      %v457 = vld [vmem:[%s406 + $0x4] sm:$0xf]
      %v458 = vld [vmem:[%s406 + $0x8] sm:$0xf]
      %v459 = vld [vmem:[%s406 + $0xc] sm:$0xf]
      %v460 = vld [vmem:[%s406 + $0x10] sm:$0xf]
      %v461 = vld [vmem:[%s406 + $0x14] sm:$0xf]
      %v462 = vld [vmem:[%s406 + $0x18] sm:$0xf]
      %v463 = vld [vmem:[%s406 + $0x1c] sm:$0xf]
      %v464 = vld [vmem:[%s406 + $0x20] sm:$0xf]
      %v465 = vld [vmem:[%s406 + $0x24] sm:$0xf]
      %v466 = vld [vmem:[%s406 + $0x28] sm:$0xf]
      %v467 = vld [vmem:[%s406 + $0x2c] sm:$0xf]
      %v468 = vld [vmem:[%s406 + $0x30] sm:$0xf]
      %v469 = vld [vmem:[%s406 + $0x34] sm:$0xf]
      %v470 = vld [vmem:[%s406 + $0x38] sm:$0xf]
      %v471 = vld [vmem:[%s406 + $0x3c] sm:$0xf]
      %v472 = vunpack.c.l.bf16 %v440
      %v473 = vunpack.c.l.bf16 %v441
      %v474 = vunpack.c.l.bf16 %v442
      %v475 = vunpack.c.l.bf16 %v443
      %v476 = vunpack.c.l.bf16 %v444
      %v477 = vunpack.c.l.bf16 %v445
      %v478 = vunpack.c.l.bf16 %v446
      %v479 = vunpack.c.l.bf16 %v447
      %v480 = vunpack.c.l.bf16 %v448
      %v481 = vunpack.c.l.bf16 %v449
      %v482 = vunpack.c.l.bf16 %v450
      %v483 = vunpack.c.l.bf16 %v451
      %v484 = vunpack.c.l.bf16 %v452
      %v485 = vunpack.c.l.bf16 %v453
      %v486 = vunpack.c.l.bf16 %v454
      %v487 = vunpack.c.l.bf16 %v455
      %v488 = vpack.c.bf16 %v439, %v439
      %489 = vmatprep.subr.mxu0 0.0
      %490 = vmatpush1.xpose.msra.mxu0 %v472
      %491 = vmatprep.subr.mxu0 0.0
      %492 = vmatpush1.xpose.msra.mxu0 %v473
      %493 = vmatprep.subr.mxu0 0.0
      %494 = vmatpush1.xpose.msra.mxu0 %v474
      %495 = vmatprep.subr.mxu0 0.0
      %496 = vmatpush1.xpose.msra.mxu0 %v475
      %497 = vmatprep.subr.mxu0 0.0
      %498 = vmatpush1.xpose.msra.mxu0 %v476
      %499 = vmatprep.subr.mxu0 0.0
      %500 = vmatpush1.xpose.msra.mxu0 %v477
      %501 = vmatprep.subr.mxu0 0.0
      %502 = vmatpush1.xpose.msra.mxu0 %v478
      %503 = vmatprep.subr.mxu0 0.0
      %504 = vmatpush1.xpose.msra.mxu0 %v479
      %505 = vmatprep.subr.mxu0 0.0
      %506 = vmatpush1.xpose.msra.mxu0 %v480
      %507 = vmatprep.subr.mxu0 0.0
      %508 = vmatpush1.xpose.msra.mxu0 %v481
      %509 = vmatprep.subr.mxu0 0.0
      %510 = vmatpush1.xpose.msra.mxu0 %v482
      %511 = vmatprep.subr.mxu0 0.0
      %512 = vmatpush1.xpose.msra.mxu0 %v483
      %513 = vmatprep.subr.mxu0 0.0
      %514 = vmatpush1.xpose.msra.mxu0 %v484
      %515 = vmatprep.subr.mxu0 0.0
      %516 = vmatpush1.xpose.msra.mxu0 %v485
      %517 = vmatprep.subr.mxu0 0.0
      %518 = vmatpush1.xpose.msra.mxu0 %v486
      %519 = vmatprep.subr.mxu0 0.0
      %520 = vmatpush1.xpose.msra.mxu0 %v487
      %521 = vmatprep.subr.mxu0 0.0
      %522 = vmatpush1.xpose.msra.mxu0 0.0
      %523 = vmatprep.subr.mxu0 0.0
      %524 = vmatpush1.xpose.msra.mxu0 0.0
      %525 = vmatprep.subr.mxu0 0.0
      %526 = vmatpush1.xpose.msra.mxu0 0.0
      %527 = vmatprep.subr.mxu0 0.0
      %528 = vmatpush1.xpose.msra.mxu0 0.0
      %529 = vmatprep.subr.mxu0 0.0
      %530 = vmatpush1.xpose.msra.mxu0 0.0
      %531 = vmatprep.subr.mxu0 0.0
      %532 = vmatpush1.xpose.msra.mxu0 0.0
      %533 = vmatprep.subr.mxu0 0.0
      %534 = vmatpush1.xpose.msra.mxu0 0.0
      %535 = vmatprep.subr.mxu0 0.0
      %536 = vmatpush1.xpose.msra.mxu0 0.0
      %537 = vmatprep.subr.mxu0 0.0
      %538 = vmatpush1.xpose.msra.mxu0 0.0
      %539 = vmatprep.subr.mxu0 0.0
      %540 = vmatpush1.xpose.msra.mxu0 0.0
      %541 = vmatprep.subr.mxu0 0.0
      %542 = vmatpush1.xpose.msra.mxu0 0.0
      %543 = vmatprep.subr.mxu0 0.0
      %544 = vmatpush1.xpose.msra.mxu0 0.0
      %545 = vmatprep.subr.mxu0 0.0
      %546 = vmatpush1.xpose.msra.mxu0 0.0
      %547 = vmatprep.subr.mxu0 0.0
      %548 = vmatpush1.xpose.msra.mxu0 0.0
      %549 = vmatprep.subr.mxu0 0.0
      %550 = vmatpush1.xpose.msra.mxu0 0.0
      %551 = vmatprep.subr.mxu0 0.0
      %552 = vmatpush1.xpose.msra.mxu0 0.0
      %553 = vmatprep.mubr.f32.mxu0 0.0
      %554 = vmatmul.mubr.f32.gmra.mrb[0].mxu0 %v439
      %v555 = vpop.f32.mrb[0].mxu0
      %v556 = vadd.f32 0.0, %v555
      %v557 = vpop.f32.mrb[0].mxu0
      %558 = vdwg.mxu0
      %v559 = vld [vmem:[%s392] sm:$0xff]
      %v560 = vld [vmem:[%s412] sm:$0x1]
      %562 = vset.pattern.permute.xlu0 0
      %563 = vperm.xlu0 %562, %v559
      %v564 = vpop.permute.xlu0 %563
      %v567 = vlaneseq
      %v568 = vshrl.u32 %v567, 7
      %v569 = vsub.s32 0, %v568
      %v570 = vrot.slane %v560, %v569
      %v572 = vadd.f32 %v564, %v570
      %v573 = vmul.f32 %v556, 0.1
      %v574 = vsub.f32 %v572, %v573
      %v575 = vmax.f32 %v574, 0.0
      %v576 = vrsqrt.pop %v575
      %v577 = vmul.f32 %v575, %v576
      %vm578 = vcmp.eq.f32.partialorder %v575, inf
      %v579 = vsel %vm578, %v575, %v577
      %vm580 = vcmp.eq.f32.partialorder %v575, 0.0
      %v581 = vand.u32 %v575, 2147483648
      %v582 = vsel %vm580, %v581, %v579
      %v599 = vunpack.c.l.b16 %v456
      %v600 = vunpack.c.l.b16 %v457
      %v601 = vunpack.c.l.b16 %v458
      %v602 = vunpack.c.l.b16 %v459
      %v603 = vunpack.c.l.b16 %v460
      %v604 = vunpack.c.l.b16 %v461
      %v605 = vunpack.c.l.b16 %v462
      %v606 = vunpack.c.l.b16 %v463
      %v607 = vunpack.c.l.b16 %v464
      %v608 = vunpack.c.l.b16 %v465
      %v609 = vunpack.c.l.b16 %v466
      %v610 = vunpack.c.l.b16 %v467
      %v611 = vunpack.c.l.b16 %v468
      %v612 = vunpack.c.l.b16 %v469
      %v613 = vunpack.c.l.b16 %v470
      %v614 = vunpack.c.l.b16 %v471
      %v615 = vpack.c.b16 %v600, %v599
      %v616 = vpack.c.b16 %v602, %v601
      %v617 = vpack.c.b16 %v604, %v603
      %v618 = vpack.c.b16 %v606, %v605
      %v619 = vpack.c.b16 %v608, %v607
      %v620 = vpack.c.b16 %v610, %v609
      %v621 = vpack.c.b16 %v612, %v611
      %v622 = vpack.c.b16 %v614, %v613
      %631 = vmatprep.subr.bf16.mxu0 0
      %632 = vmatpush1.bf16.xpose.msra.mxu0 %v615
      %633 = vmatprep.subr.bf16.mxu0 0
      %634 = vmatpush1.bf16.xpose.msra.mxu0 %v616
      %635 = vmatprep.subr.bf16.mxu0 0
      %636 = vmatpush1.bf16.xpose.msra.mxu0 %v617
      %637 = vmatprep.subr.bf16.mxu0 0
      %638 = vmatpush1.bf16.xpose.msra.mxu0 %v618
      %639 = vmatprep.subr.bf16.mxu0 0
      %640 = vmatpush1.bf16.xpose.msra.mxu0 %v619
      %641 = vmatprep.subr.bf16.mxu0 0
      %642 = vmatpush1.bf16.xpose.msra.mxu0 %v620
      %643 = vmatprep.subr.bf16.mxu0 0
      %644 = vmatpush1.bf16.xpose.msra.mxu0 %v621
      %645 = vmatprep.subr.bf16.mxu0 0
      %646 = vmatpush1.bf16.xpose.msra.mxu0 %v622
      %647 = vmatprep.subr.bf16.mxu0 0
      %648 = vmatpush1.bf16.xpose.msra.mxu0 0
      %649 = vmatprep.subr.bf16.mxu0 0
      %650 = vmatpush1.bf16.xpose.msra.mxu0 0
      %651 = vmatprep.subr.bf16.mxu0 0
      %652 = vmatpush1.bf16.xpose.msra.mxu0 0
      %653 = vmatprep.subr.bf16.mxu0 0
      %654 = vmatpush1.bf16.xpose.msra.mxu0 0
      %655 = vmatprep.subr.bf16.mxu0 0
      %656 = vmatpush1.bf16.xpose.msra.mxu0 0
      %657 = vmatprep.subr.bf16.mxu0 0
      %658 = vmatpush1.bf16.xpose.msra.mxu0 0
      %659 = vmatprep.subr.bf16.mxu0 0
      %660 = vmatpush1.bf16.xpose.msra.mxu0 0
      %661 = vmatprep.subr.bf16.mxu0 0
      %662 = vmatpush1.bf16.xpose.msra.mxu0 0
      %663 = vmatprep.mubr.bf16.mxu0 0
      %664 = vmatmul.mubr.bf16.gmra.mrb[0].mxu0 %v488
      %v665 = vpop.f32.mrb[0].mxu0
      %v666 = vadd.f32 0.0, %v665
      %v667 = vpop.f32.mrb[0].mxu0
      %v668 = vpop.f32.mrb[0].mxu0
      %v669 = vpop.f32.mrb[0].mxu0
      %670 = vdwg.mxu0
      %v671 = vld [vmem:[%s417] sm:$0x1]
      %v673 = vlaneseq
      %v674 = vshrl.u32 %v673, 7
      %v675 = vsub.s32 0, %v674
      %v676 = vrot.slane %v671, %v675
      %v678 = vsub.f32 %v666, %v676
      %v679 = vmul.f32 %v678, 0.2236068
      %v680 = vsub.f32 0.0, %v582
      %v681 = vmul.f32 %v680, 1.442695
      %v682 = vpow.pop %v681
      %v683 = vmul.f32 %v682, 0.016666668
      %v684 = vadd.f32 %v582, 1.0
      %v685 = vmul.f32 %v683, %v684
      %v686 = vmul.f32 %v683, %v679
      %687 = vadd.xlane.f32.xlu0 %v686
      %v688 = vpop.xlane.xlu0 %687
      %v689 = vmul.f32 %v688, %v439
      %v690 = vpack.c.bf16 %v686, %v686
      %v707 = vunpack.c.l.b16 %v440
      %v708 = vunpack.c.l.b16 %v441
      %v709 = vunpack.c.l.b16 %v442
      %v710 = vunpack.c.l.b16 %v443
      %v711 = vunpack.c.l.b16 %v444
      %v712 = vunpack.c.l.b16 %v445
      %v713 = vunpack.c.l.b16 %v446
      %v714 = vunpack.c.l.b16 %v447
      %v715 = vunpack.c.l.b16 %v448
      %v716 = vunpack.c.l.b16 %v449
      %v717 = vunpack.c.l.b16 %v450
      %v718 = vunpack.c.l.b16 %v451
      %v719 = vunpack.c.l.b16 %v452
      %v720 = vunpack.c.l.b16 %v453
      %v721 = vunpack.c.l.b16 %v454
      %v722 = vunpack.c.l.b16 %v455
      %v723 = vpack.c.b16 %v708, %v707
      %v724 = vpack.c.b16 %v710, %v709
      %v725 = vpack.c.b16 %v712, %v711
      %v726 = vpack.c.b16 %v714, %v713
      %v727 = vpack.c.b16 %v716, %v715
      %v728 = vpack.c.b16 %v718, %v717
      %v729 = vpack.c.b16 %v720, %v719
      %v730 = vpack.c.b16 %v722, %v721
      %739 = vmatprep.subr.bf16.mxu0 0
      %740 = vmatpush1.bf16.msra.mxu0 %v723
      %741 = vmatprep.subr.bf16.mxu0 0
      %742 = vmatpush1.bf16.msra.mxu0 %v724
      %743 = vmatprep.subr.bf16.mxu0 0
      %744 = vmatpush1.bf16.msra.mxu0 %v725
      %745 = vmatprep.subr.bf16.mxu0 0
      %746 = vmatpush1.bf16.msra.mxu0 %v726
      %747 = vmatprep.subr.bf16.mxu0 0
      %748 = vmatpush1.bf16.msra.mxu0 %v727
      %749 = vmatprep.subr.bf16.mxu0 0
      %750 = vmatpush1.bf16.msra.mxu0 %v728
      %751 = vmatprep.subr.bf16.mxu0 0
      %752 = vmatpush1.bf16.msra.mxu0 %v729
      %753 = vmatprep.subr.bf16.mxu0 0
      %754 = vmatpush1.bf16.msra.mxu0 %v730
      %755 = vmatprep.subr.bf16.mxu0 0
      %756 = vmatpush1.bf16.msra.mxu0 0
      %757 = vmatprep.subr.bf16.mxu0 0
      %758 = vmatpush1.bf16.msra.mxu0 0
      %759 = vmatprep.subr.bf16.mxu0 0
      %760 = vmatpush1.bf16.msra.mxu0 0
      %761 = vmatprep.subr.bf16.mxu0 0
      %762 = vmatpush1.bf16.msra.mxu0 0
      %763 = vmatprep.subr.bf16.mxu0 0
      %764 = vmatpush1.bf16.msra.mxu0 0
      %765 = vmatprep.subr.bf16.mxu0 0
      %766 = vmatpush1.bf16.msra.mxu0 0
      %767 = vmatprep.subr.bf16.mxu0 0
      %768 = vmatpush1.bf16.msra.mxu0 0
      %769 = vmatprep.subr.bf16.mxu0 0
      %770 = vmatpush1.bf16.msra.mxu0 0
      %771 = vmatprep.mubr.bf16.mxu0 0
      %772 = vmatmul.mubr.bf16.gmra.mrb[0].mxu0 %v690
      %v773 = vpop.f32.mrb[0].mxu0
      %v774 = vadd.f32 0.0, %v773
      %v775 = vpop.f32.mrb[0].mxu0
      %v776 = vpop.f32.mrb[0].mxu0
      %v777 = vpop.f32.mrb[0].mxu0
      %778 = vdwg.mxu0
      %v779 = vsub.f32 %v689, %v774
      %v780 = vmul.f32 %v779, 0.2236068
      %v781 = vpack.c.bf16 %v685, %v685
      %782 = vmatprep.subr.bf16.mxu0 0
      %783 = vmatpush1.bf16.msra.mxu0 %v615
      %784 = vmatprep.subr.bf16.mxu0 0
      %785 = vmatpush1.bf16.msra.mxu0 %v616
      %786 = vmatprep.subr.bf16.mxu0 0
      %787 = vmatpush1.bf16.msra.mxu0 %v617
      %788 = vmatprep.subr.bf16.mxu0 0
      %789 = vmatpush1.bf16.msra.mxu0 %v618
      %790 = vmatprep.subr.bf16.mxu0 0
      %791 = vmatpush1.bf16.msra.mxu0 %v619
      %792 = vmatprep.subr.bf16.mxu0 0
      %793 = vmatpush1.bf16.msra.mxu0 %v620
      %794 = vmatprep.subr.bf16.mxu0 0
      %795 = vmatpush1.bf16.msra.mxu0 %v621
      %796 = vmatprep.subr.bf16.mxu0 0
      %797 = vmatpush1.bf16.msra.mxu0 %v622
      %798 = vmatprep.subr.bf16.mxu0 0
      %799 = vmatpush1.bf16.msra.mxu0 0
      %800 = vmatprep.subr.bf16.mxu0 0
      %801 = vmatpush1.bf16.msra.mxu0 0
      %802 = vmatprep.subr.bf16.mxu0 0
      %803 = vmatpush1.bf16.msra.mxu0 0
      %804 = vmatprep.subr.bf16.mxu0 0
      %805 = vmatpush1.bf16.msra.mxu0 0
      %806 = vmatprep.subr.bf16.mxu0 0
      %807 = vmatpush1.bf16.msra.mxu0 0
      %808 = vmatprep.subr.bf16.mxu0 0
      %809 = vmatpush1.bf16.msra.mxu0 0
      %810 = vmatprep.subr.bf16.mxu0 0
      %811 = vmatpush1.bf16.msra.mxu0 0
      %812 = vmatprep.subr.bf16.mxu0 0
      %813 = vmatpush1.bf16.msra.mxu0 0
      %814 = vmatprep.mubr.bf16.mxu0 0
      %815 = vmatmul.mubr.bf16.gmra.mrb[0].mxu0 %v781
      %v816 = vpop.f32.mrb[0].mxu0
      %v817 = vadd.f32 0.0, %v816
      %v818 = vpop.f32.mrb[0].mxu0
      %v819 = vpop.f32.mrb[0].mxu0
      %v820 = vpop.f32.mrb[0].mxu0
      %821 = vdwg.mxu0
      %v822 = vld [vmem:[%s423] sm:$0xff]
      %v823 = vsub.f32 %v780, %v817
      %v824 = vadd.f32 %v822, %v823
      %825 = vst [vmem:[%s423] sm:$0xff] %v824
      %v826 = vld [vmem:[%s429] sm:$0xff]
      %v827 = vmul.f32 %v685, %v679
      %828 = vadd.xlane.f32.xlu0 %v827
      %v829 = vpop.xlane.xlu0 %828
      %v830 = vadd.f32 %v826, %v829
      %vm831 = vcmask 7168
      %832 = vst.msk [vmem:[%s429] sm:$0xff] %vm831, %v830
      %s833 = sadd.s32 %s24, %s25
      %p834 = scmp.lt.s32.totalorder %s833, 1
      %s835 = scalar_select %p834, %s833, 1
      %s836 = smul.addr %s835, 8
      %s837 = scalar_lea.vmem %s6, %s836
      %s838 = sadd.s32 %s24, %s25
      %p839 = scmp.lt.s32.totalorder %s838, 1
      %s840 = scalar_select %p839, %s838, 1
      %s841 = smul.addr %s840, 8
      %s842 = scalar_lea.vmem %s7, %s841
      // Predicated region
      $region49: #{gdml_predict.1} parent=43 // pred_check
        %p843 = pneg %p222
      $region50: #{gdml_predict.1} parent=43 // pred_check_branch
        %845 = sbr.rel (%p843) target = $region52
      $region51: #{gdml_predict.1} parent=43 // pred_region
        %s846 = sadd.s32 %s24, %s25
      $region52: #{gdml_predict.1} parent=43 // pred_fallthru
        _
      // Predicated region
      $region53: #{gdml_predict.1} parent=43 // pred_check
        %p847 = pneg %p250
      $region54: #{gdml_predict.1} parent=43 // pred_check_branch
        %849 = sbr.rel (%p847) target = $region56
      $region55: #{gdml_predict.1} parent=43 // pred_region
        %s850 = sadd.s32 %s24, %s25
      $region56: #{gdml_predict.1} parent=43 // pred_fallthru
        _
    $region44: #{gdml_predict.1} parent=5 // pred_fallthru
      _
    %p851 = scmp.le.s32.totalorder 2, %s14
    // Predicated region
    $region57: #{gdml_predict.1} parent=5 // pred_check
      %p852 = pneg %p851
    $region58: #{gdml_predict.1} parent=5 // pred_check_branch
      %854 = sbr.rel (%p852) target = $region60
    $region59: #{gdml_predict.1} parent=5 // pred_region
      %s855 = ssub.s32 %s14, 2
      // Predicated region
      $region61: #{gdml_predict.1} parent=59 // pred_check
        %p856 = pneg %p228
      $region62: #{gdml_predict.1} parent=59 // pred_check_branch
        %858 = sbr.rel (%p856) target = $region64
      $region63: #{gdml_predict.1} parent=59 // pred_region
        %s859 = sadd.s32 %s27, %s28
        %p860 = scmp.lt.s32.totalorder %s859, 1
        %s861 = scalar_select %p860, %s859, 1
        %s862 = smul.addr %s861, 8
        %s863 = scalar_lea.vmem %s6, %s862
      $region64: #{gdml_predict.1} parent=59 // pred_fallthru
        _
      // Predicated region
      $region65: #{gdml_predict.1} parent=59 // pred_check
        %p864 = pneg %p256
      $region66: #{gdml_predict.1} parent=59 // pred_check_branch
        %866 = sbr.rel (%p864) target = $region68
      $region67: #{gdml_predict.1} parent=59 // pred_region
        %s867 = sadd.s32 %s27, %s28
        %p868 = scmp.lt.s32.totalorder %s867, 1
        %s869 = scalar_select %p868, %s867, 1
        %s870 = smul.addr %s869, 8
        %s871 = scalar_lea.vmem %s7, %s870
      $region68: #{gdml_predict.1} parent=59 // pred_fallthru
        _
    $region60: #{gdml_predict.1} parent=5 // pred_fallthru
      _
  $region6: #{gdml_predict.1} parent=0 // loop_footer
    %s18 = sadd.s32 1, %s14
  $region7: #{gdml_predict.1} parent=0 // loop_footer_branch
    %13 = sbr.rel target = $region3
  $region8: #{gdml_predict.1} parent=0 // loop_exit
    _

</llo_original>
